<compile_context>
chip_gen: v7x
topology: tpu7x:2x2x1
jax: 0.10.0
libtpu: 0.0.40
codegen_flags: <defaults>
</compile_context>

<pallas_src>
import jax
import jax.numpy as jnp
from jax import lax
from jax.experimental import pallas as pl
from jax.experimental.pallas import tpu as pltpu

LANE = 128          # pad the tiny class dim (C=3) to a lane-dense width
SUBLANE_PAD = 16    # bf16 packs 16 rows per vreg sublane group -> pad batch to x16


def feedback_head_kernel(x_ref, w_ref, b_ref, o_ref):
    """Single invocation: logits = x @ W + b, one MXU matmul, f32 accumulate."""
    acc = jnp.dot(x_ref[...], w_ref[...], preferred_element_type=jnp.float32)
    o_ref[...] = acc + b_ref[...]          # (B_pad, LANE) + (1, LANE) broadcast


def prepare_head_params(weight, bias):
    """One-time (model-load) preparation of the classifier parameters.

    weight: (C, 4H) f32 in PyTorch Linear layout; bias: (C,) f32.
    Returns:
      w_pad: (4H, LANE) bf16 -- transposed, column-padded, with the H-sized row
             blocks REVERSED so they line up with a CLS slab built in ascending
             layer order [L-4, L-3, L-2, L-1] (torch cat order is
             [h[-1], h[-2], h[-3], h[-4]], i.e. the reverse).
      b_pad: (1, LANE) f32.
    """
    C, H4 = weight.shape
    assert H4 % 4 == 0
    H = H4 // 4
    w_t = jnp.transpose(weight)                        # (4H, C)
    w_blocks = w_t.reshape(4, H, C)                    # block k multiplies layer L-1-k
    w_rev = w_blocks[::-1].reshape(4 * H, C)           # block j multiplies layer L-4+j
    w_pad = jnp.zeros((4 * H, LANE), jnp.float32).at[:, :C].set(w_rev)
    b_pad = jnp.zeros((1, LANE), jnp.float32).at[0, :C].set(bias)
    return w_pad.astype(jnp.bfloat16), b_pad


def feedback_head(all_hidden_states, w_pad, b_pad, num_classes):
    """all_hidden_states: (L, B, S, H) f32; w_pad/b_pad from prepare_head_params.
    Returns logits (B, num_classes) f32."""
    L, B, S, H = all_hidden_states.shape
    assert L >= 4, "need at least 4 hidden states"

    # One contiguous slice of the 4 CLS rows (layer order L-4..L-1); only
    # 4*B*H floats are read.  The [-1..-4] reversal lives in w_pad.
    cls = lax.slice(all_hidden_states, (L - 4, 0, 0, 0), (L, B, 1, H))   # (4,B,1,H)
    slab = jnp.transpose(cls[:, :, 0, :], (1, 0, 2)).reshape(B, 4 * H)   # (B, 4H)

    # Sublane-align the batch and cast activations to bf16 (f32 accumulation
    # happens inside the kernel; padded rows are zero and discarded below).
    B_pad = ((B + SUBLANE_PAD - 1) // SUBLANE_PAD) * SUBLANE_PAD
    slab = jnp.pad(slab, ((0, B_pad - B), (0, 0))).astype(jnp.bfloat16)

    out_padded = pl.pallas_call(
        feedback_head_kernel,
        out_shape=jax.ShapeDtypeStruct((B_pad, LANE), jnp.float32),
        in_specs=[
            pl.BlockSpec(memory_space=pltpu.MemorySpace.VMEM),   # (B_pad, 4H) bf16
            pl.BlockSpec(memory_space=pltpu.MemorySpace.VMEM),   # (4H, LANE) bf16
            pl.BlockSpec(memory_space=pltpu.MemorySpace.VMEM),   # (1, LANE)  f32
        ],
        out_specs=pl.BlockSpec(memory_space=pltpu.MemorySpace.VMEM),
    )(slab, w_pad, b_pad)

    return out_padded[:B, :num_classes]


def reference_head(all_hidden_states, weight, bias):
    """Plain-JAX f32 reference mirroring the PyTorch forward (eval mode)."""
    cat = jnp.concatenate(
        [all_hidden_states[-1], all_hidden_states[-2],
         all_hidden_states[-3], all_hidden_states[-4]], axis=-1)          # (B, S, 4H)
    seq_out = cat[:, 0]                                                   # (B, 4H)
    logits = seq_out @ weight.T + bias                                    # (B, C)
    return logits  # mean of 5 identical (eval-mode) dropout branches == itself


if __name__ == "__main__":
    # Small shapes consistent with the module's forward:
    #   L = num_layers + 1 hidden states (>= 4), batch B, seq S, hidden H.
    L, B, S, H = 5, 2, 8, 32
    C = 3  # CONFIG['num_classes']

    key = jax.random.PRNGKey(0)
    k_hs, k_w = jax.random.split(key, 2)

    # Synthetic backbone output: stacked hidden states (what torch.stack gives).
    all_hidden_states = jax.random.normal(k_hs, (L, B, S, H), dtype=jnp.float32)

    # Deterministic Linear(4H -> C) params (normal(0, initializer_range=0.02),
    # zero bias), mirroring _init_weights.
    weight = 0.02 * jax.random.normal(k_w, (C, 4 * H), dtype=jnp.float32)
    bias = jnp.zeros((C,), dtype=jnp.float32)

    # Model-load-time constant preparation (done exactly once).
    w_pad, b_pad = prepare_head_params(weight, bias)
    w_pad = jax.block_until_ready(w_pad)
    b_pad = jax.block_until_ready(b_pad)

    logits = feedback_head(all_hidden_states, w_pad, b_pad, C)
    logits = jax.block_until_ready(logits)

    ref = reference_head(all_hidden_states, weight, bias)
    assert logits.shape == (B, C), logits.shape
    # bf16 activations/weights with f32 accumulation -> loose-but-tight-enough tol.
    assert jnp.allclose(logits, ref, atol=2e-2, rtol=1e-2), (logits, ref)

    print("KERNEL_OK")
</pallas_src>

<mosaic_0001>
module attributes {stable_mosaic.version = 11 : i64} {
  func.func @feedback_head_kernel(%arg0: memref<16x128xbf16, #tpu.memory_space<vmem>>, %arg1: memref<128x128xbf16, #tpu.memory_space<vmem>>, %arg2: memref<1x128xf32, #tpu.memory_space<vmem>>, %arg3: memref<16x128xf32, #tpu.memory_space<vmem>>) attributes {dimension_semantics = [], scalar_prefetch = 0 : i64, scratch_operands = 0 : i64, tpu.core_type = #tpu.core_type<tc>} {
    %c0 = arith.constant 0 : index
    %c0_0 = arith.constant 0 : index
    %0 = vector.load %arg0[%c0, %c0_0] : memref<16x128xbf16, #tpu.memory_space<vmem>>, vector<16x128xbf16>
    %c0_1 = arith.constant 0 : index
    %c0_2 = arith.constant 0 : index
    %1 = vector.load %arg1[%c0_1, %c0_2] : memref<128x128xbf16, #tpu.memory_space<vmem>>, vector<128x128xbf16>
    %cst = arith.constant dense<0.000000e+00> : vector<16x128xf32>
    %2 = tpu.matmul %0, %1, %cst {dimension_numbers = #tpu.dot_dimension_numbers<[1], [0], [0], [1], [0, 0, 1, 1], [], []>} : vector<16x128xbf16>, vector<128x128xbf16>, vector<16x128xf32> -> vector<16x128xf32>
    %c0_3 = arith.constant 0 : index
    %c0_4 = arith.constant 0 : index
    %3 = vector.load %arg2[%c0_3, %c0_4] : memref<1x128xf32, #tpu.memory_space<vmem>>, vector<1x128xf32>
    %4 = vector.broadcast %3 : vector<1x128xf32> to vector<16x128xf32>
    %5 = arith.addf %2, %4 : vector<16x128xf32>
    %c0_5 = arith.constant 0 : index
    %c0_6 = arith.constant 0 : index
    %6 = vector.load %arg3[%c0_5, %c0_6] : memref<16x128xf32, #tpu.memory_space<vmem>>, vector<16x128xf32>
    tpu.vector_store %arg3[%c0_5, %c0_6], %5 {strides = array<i32>} : memref<16x128xf32, #tpu.memory_space<vmem>>, vector<16x128xf32>,
    return
  }
}

</mosaic_0001>

<llo_original>
// kernel: tpu_custom_call.1
$region0: #{tpu_custom_call.1}
  #allocation0 [shape = 'u32[]', space=smem, size = 0x4, offset = 0x4, fixed_abs, tag = 'smem constant byte address 0x4 - core index']
  #allocation1 [shape = 'u32[144,128]{1,0:T(1,128)}', space=vmem, size = 0x12000, scoped, tag = 'internal scratch']
  %s0 = inlined_call_operand.hbm [shape: bf16[16,128], index: 0, kind: input, shape index: {}]
  %s1 = inlined_call_operand.hbm [shape: bf16[128,128], index: 1, kind: input, shape index: {}]
  %s2 = inlined_call_operand.vmem [shape: f32[1,128], index: 2, kind: input, shape index: {}]
  %s3 = inlined_call_operand.hbm [shape: f32[16,128], index: 3, kind: output, shape index: {}]
  %s4 = sld [smem:[#allocation0]]
  $region30: #{tpu_custom_call.1} parent=0
    _
  %s6 = ssub.s32 1, %s4
  %s7 = scalar_select 0, %s6, %s4
  $region1: #{tpu_custom_call.1} parent=0
    #allocation2 [shape = 'u8[4096]{0}', space=vmem, size = 0x1000, scoped, tag = 'input window, operand 0, single buffered']
    #allocation3 [shape = 's32[1]{0}', space=sflag, size = 0x4, scoped, tag = 'scoped memory for tpu_custom_call.1']
    #allocation4 [shape = 's32[1]{0}', space=sflag, size = 0x4, scoped, tag = 'scoped memory for tpu_custom_call.1']
    #allocation5 [shape = 'u8[32768]{0}', space=vmem, size = 0x8000, scoped, tag = 'input window, operand 1, single buffered']
    #allocation6 [shape = 's32[1]{0}', space=sflag, size = 0x4, scoped, tag = 'scoped memory for tpu_custom_call.1']
    #allocation7 [shape = 'u8[8192]{0}', space=vmem, size = 0x2000, scoped, tag = 'output window, operand 0, single buffered']
    %8 = vsyncpa [#allocation3], 0
    %9 = vsyncpa [#allocation6], 0
    %10 = vsyncpa [#allocation4], 0
    // Predicated region
    $region2: #{tpu_custom_call.1} parent=1 // pred_check
      _
    $region3: #{tpu_custom_call.1} parent=1 // pred_check_branch
      %12 = sbr.rel (0) target = $region5
    $region4: #{tpu_custom_call.1} parent=1 // pred_region
      %s14 = ssub.s32 128, 128
      %15 = vsyncadd [#allocation3], %s14
      %s16 = sshll.u32 [#allocation2], 4
      %s17 = int_to_ptr.vmem [resolvable:$true] %s16
      %22 = dma.hbm_to_vmem [thread:$0]  %s0, 128, %s17, [#allocation3], 64, 64, 4
    $region5: #{tpu_custom_call.1} parent=1 // pred_fallthru
      _
    // Predicated region
    $region6: #{tpu_custom_call.1} parent=1 // pred_check
      _
    $region7: #{tpu_custom_call.1} parent=1 // pred_check_branch
      %24 = sbr.rel (0) target = $region9
    $region8: #{tpu_custom_call.1} parent=1 // pred_region
      %s26 = ssub.s32 1024, 1024
      %27 = vsyncadd [#allocation6], %s26
      %s28 = sshll.u32 [#allocation5], 4
      %s29 = int_to_ptr.vmem [resolvable:$true] %s28
      %34 = dma.hbm_to_vmem [thread:$0]  %s1, 1024, %s29, [#allocation6], 64, 64, 4
    $region9: #{tpu_custom_call.1} parent=1 // pred_fallthru
      _
    // Predicated region
    $region10: #{tpu_custom_call.1} parent=1 // pred_check
      _
    $region11: #{tpu_custom_call.1} parent=1 // pred_check_branch
      %36 = sbr.rel (0) target = $region13
    $region12: #{tpu_custom_call.1} parent=1 // pred_region
      _
    $region13: #{tpu_custom_call.1} parent=1 // pred_fallthru
      _
    // Predicated region
    $region14: #{tpu_custom_call.1} parent=1 // pred_check
      _
    $region15: #{tpu_custom_call.1} parent=1 // pred_check_branch
      %38 = sbr.rel (0) target = $region17
    $region16: #{tpu_custom_call.1} parent=1 // pred_region
      %39 = dma.done [#allocation3], 128
    $region17: #{tpu_custom_call.1} parent=1 // pred_fallthru
      _
    // Predicated region
    $region18: #{tpu_custom_call.1} parent=1 // pred_check
      _
    $region19: #{tpu_custom_call.1} parent=1 // pred_check_branch
      %41 = sbr.rel (0) target = $region21
    $region20: #{tpu_custom_call.1} parent=1 // pred_region
      %42 = dma.done [#allocation6], 1024
    $region21: #{tpu_custom_call.1} parent=1 // pred_fallthru
      _
    %v44 = vld [vmem:[#allocation2] sm:$0xf]
    %v45 = vld [vmem:[#allocation2 + $0x4] sm:$0xf]
    %v46 = vld [vmem:[#allocation5] sm:$0xf]
    %v47 = vld [vmem:[#allocation5 + $0x4] sm:$0xf]
    %v48 = vld [vmem:[#allocation5 + $0x8] sm:$0xf]
    %v49 = vld [vmem:[#allocation5 + $0xc] sm:$0xf]
    %v50 = vld [vmem:[#allocation5 + $0x10] sm:$0xf]
    %v51 = vld [vmem:[#allocation5 + $0x14] sm:$0xf]
    %v52 = vld [vmem:[#allocation5 + $0x18] sm:$0xf]
    %v53 = vld [vmem:[#allocation5 + $0x1c] sm:$0xf]
    %v54 = vld [vmem:[#allocation5 + $0x20] sm:$0xf]
    %v55 = vld [vmem:[#allocation5 + $0x24] sm:$0xf]
    %v56 = vld [vmem:[#allocation5 + $0x28] sm:$0xf]
    %v57 = vld [vmem:[#allocation5 + $0x2c] sm:$0xf]
    %v58 = vld [vmem:[#allocation5 + $0x30] sm:$0xf]
    %v59 = vld [vmem:[#allocation5 + $0x34] sm:$0xf]
    %v60 = vld [vmem:[#allocation5 + $0x38] sm:$0xf]
    %v61 = vld [vmem:[#allocation5 + $0x3c] sm:$0xf]
    %v62 = vld [vmem:[%s2] sm:$0x1]
    %v64 = vlaneseq
    %v65 = vshrl.u32 %v64, 7
    %v66 = vsub.s32 0, %v65
    %v67 = vrot.slane %v62, %v66
    %v71 = vunpack.c.l.b16 %v44
    %v72 = vunpack.c.l.b16 %v45
    %v73 = vpack.c.b16 %v72, %v71
    %v91 = vunpack.c.l.b16 %v46
    %v92 = vunpack.c.l.b16 %v47
    %v93 = vunpack.c.l.b16 %v48
    %v94 = vunpack.c.l.b16 %v49
    %v95 = vunpack.c.l.b16 %v50
    %v96 = vunpack.c.l.b16 %v51
    %v97 = vunpack.c.l.b16 %v52
    %v98 = vunpack.c.l.b16 %v53
    %v99 = vunpack.c.l.b16 %v54
    %v100 = vunpack.c.l.b16 %v55
    %v101 = vunpack.c.l.b16 %v56
    %v102 = vunpack.c.l.b16 %v57
    %v103 = vunpack.c.l.b16 %v58
    %v104 = vunpack.c.l.b16 %v59
    %v105 = vunpack.c.l.b16 %v60
    %v106 = vunpack.c.l.b16 %v61
    %v107 = vpack.c.b16 %v92, %v91
    %v108 = vpack.c.b16 %v94, %v93
    %v109 = vpack.c.b16 %v96, %v95
    %v110 = vpack.c.b16 %v98, %v97
    %v111 = vpack.c.b16 %v100, %v99
    %v112 = vpack.c.b16 %v102, %v101
    %v113 = vpack.c.b16 %v104, %v103
    %v114 = vpack.c.b16 %v106, %v105
    %123 = vmatprep.subr.bf16.mxu0 0
    %124 = vmatpush1.bf16.msra.mxu0 %v107
    %125 = vmatprep.subr.bf16.mxu0 0
    %126 = vmatpush1.bf16.msra.mxu0 %v108
    %127 = vmatprep.subr.bf16.mxu0 0
    %128 = vmatpush1.bf16.msra.mxu0 %v109
    %129 = vmatprep.subr.bf16.mxu0 0
    %130 = vmatpush1.bf16.msra.mxu0 %v110
    %131 = vmatprep.subr.bf16.mxu0 0
    %132 = vmatpush1.bf16.msra.mxu0 %v111
    %133 = vmatprep.subr.bf16.mxu0 0
    %134 = vmatpush1.bf16.msra.mxu0 %v112
    %135 = vmatprep.subr.bf16.mxu0 0
    %136 = vmatpush1.bf16.msra.mxu0 %v113
    %137 = vmatprep.subr.bf16.mxu0 0
    %138 = vmatpush1.bf16.msra.mxu0 %v114
    %139 = vmatprep.subr.bf16.mxu0 0
    %140 = vmatpush1.bf16.msra.mxu0 0
    %141 = vmatprep.subr.bf16.mxu0 0
    %142 = vmatpush1.bf16.msra.mxu0 0
    %143 = vmatprep.subr.bf16.mxu0 0
    %144 = vmatpush1.bf16.msra.mxu0 0
    %145 = vmatprep.subr.bf16.mxu0 0
    %146 = vmatpush1.bf16.msra.mxu0 0
    %147 = vmatprep.subr.bf16.mxu0 0
    %148 = vmatpush1.bf16.msra.mxu0 0
    %149 = vmatprep.subr.bf16.mxu0 0
    %150 = vmatpush1.bf16.msra.mxu0 0
    %151 = vmatprep.subr.bf16.mxu0 0
    %152 = vmatpush1.bf16.msra.mxu0 0
    %153 = vmatprep.subr.bf16.mxu0 0
    %154 = vmatpush1.bf16.msra.mxu0 0
    %155 = vmatprep.mubr.bf16.mxu0 0
    %156 = vmatmul.mubr.bf16.gmra.mrb[0].mxu0 %v73
    %v157 = vpop.f32.mrb[0].mxu0
    %v158 = vadd.f32 %v67, %v157
    %v159 = vpop.f32.mrb[0].mxu0
    %v160 = vpop.f32.mrb[0].mxu0
    %v161 = vadd.f32 %v67, %v160
    %v162 = vpop.f32.mrb[0].mxu0
    %163 = vdwg.mxu0
    %164 = vst [vmem:[#allocation7] sm:$0xff] %v158
    %165 = vst [vmem:[#allocation7 + $0x8] sm:$0xff] %v161
    // Predicated region
    $region22: #{tpu_custom_call.1} parent=1 // pred_check
      _
    $region23: #{tpu_custom_call.1} parent=1 // pred_check_branch
      %167 = sbr.rel (0) target = $region25
    $region24: #{tpu_custom_call.1} parent=1 // pred_region
      %s169 = ssub.s32 256, 256
      %170 = vsyncadd [#allocation4], %s169
      %s171 = sshll.u32 [#allocation7], 4
      %s172 = int_to_ptr.vmem [resolvable:$true] %s171
      %177 = dma.vmem_to_hbm [thread:$0]  %s172, 256, %s3, [#allocation4], 128, 128, 8
    $region25: #{tpu_custom_call.1} parent=1 // pred_fallthru
      _
    // Predicated region
    $region26: #{tpu_custom_call.1} parent=1 // pred_check
      _
    $region27: #{tpu_custom_call.1} parent=1 // pred_check_branch
      %179 = sbr.rel (0) target = $region29
    $region28: #{tpu_custom_call.1} parent=1 // pred_region
      %180 = dma.done [#allocation4], 256
    $region29: #{tpu_custom_call.1} parent=1 // pred_fallthru
      _
    %181 = vsyncpa [#allocation3], 1
    %182 = vsyncpa [#allocation6], 1
    %183 = vsyncpa [#allocation4], 1

</llo_original>
